<compile_context>
chip_gen: v7x
topology: tpu7x:2x2x1
jax: 0.10.0
libtpu: 0.0.40
codegen_flags: <defaults>
</compile_context>

<pallas_src>
import jax
import jax.numpy as jnp
from jax.experimental import pallas as pl
from jax.experimental.pallas import tpu as pltpu


# ---------------------------------------------------------------------------
# Kernels
# ---------------------------------------------------------------------------

def _linear_tanh_kernel(emb_ref, w1_ref, b1_ref, h_ref):
    """h_tile = tanh(emb @ W1_tile + b1_tile); f32 MXU accumulation."""
    x = emb_ref[...]                               # (S, E)
    w = w1_ref[...]                                # (E, TM)
    y = jnp.dot(x.astype(w.dtype), w, preferred_element_type=jnp.float32)
    h_ref[...] = jnp.tanh(y + b1_ref[...]).astype(h_ref.dtype)


def _out_proj_kernel(h_ref, w2_ref, b2_ref, out_ref):
    """out_tile = h @ W2_tile + b2_tile; f32 MXU accumulation.

    h is already stored in the streaming dtype (bf16 by default), so there is
    no per-grid-step cast of the activations.
    """
    y = jnp.dot(h_ref[...], w2_ref[...], preferred_element_type=jnp.float32)
    out_ref[...] = (y + b2_ref[...]).astype(out_ref.dtype)


# ---------------------------------------------------------------------------
# Tiling / budget helpers
# ---------------------------------------------------------------------------

def _round_up(x, m):
    return ((x + m - 1) // m) * m


def _vmem_budget_bytes():
    """Generation-aware per-kernel VMEM budget.

    v7x only has 64 MiB of physical VMEM per TensorCore, so we never request
    all of it -- ~0.65 x capacity leaves headroom for compiler-internal
    scratch.  v5e/v6e (128 MiB) get a larger (capped) budget.
    """
    try:
        cap = pltpu.get_tpu_info().vmem_capacity_bytes
    except Exception:
        cap = 64 << 20            # assume the smallest (v7x) if unknown
    return min(int(cap * 0.65), 80 << 20)


def _choose_tile(total, fixed_bytes, per_col_bytes, budget, override=None):
    """Largest multiple-of-128 divisor of `total` whose buffers fit `budget`.

    `total` must already be a multiple of 128.  Using a divisor (rather than
    padding up to the tile) means no zero columns are ever streamed.
    """
    assert total % 128 == 0 and total >= 128
    if override is not None:
        tgt = max(128, (int(override) // 128) * 128)
    else:
        avail = budget - fixed_bytes
        if avail <= 0:
            tgt = 128
        else:
            tgt = max(128, (avail // max(per_col_bytes, 1)) // 128 * 128)
    tgt = min(tgt, total)
    t = tgt
    while t > 128:
        if total % t == 0:
            return t
        t -= 128
    return 128


# ---------------------------------------------------------------------------
# Wrappers
# ---------------------------------------------------------------------------

def _linear_tanh(emb, w1, b1, *, h_dtype, budget):
    """h = tanh(emb @ W1 + b1) -> (S, M128) in h_dtype (pad columns are 0)."""
    S, E = emb.shape
    M = w1.shape[1]
    M128 = _round_up(M, 128)
    if M128 != M:
        w1 = jnp.pad(w1, ((0, 0), (0, M128 - M)))
        b1 = jnp.pad(b1, ((0, M128 - M),))
    b1_2d = b1.reshape(1, M128).astype(jnp.float32)

    h_itemsize = jnp.dtype(h_dtype).itemsize
    slack = 4 << 20
    fixed = 2 * S * _round_up(E, 128) * emb.dtype.itemsize + slack
    per_col = (2 * E * w1.dtype.itemsize       # W1 tiles (double buffered)
               + 2 * 8 * 4                     # b1 tiles ((1,tm) -> (8,tm))
               + 2 * S * h_itemsize)           # h tiles
    tm = _choose_tile(M128, fixed, per_col, budget)    # full M128 if it fits
    grid = (M128 // tm,)

    flops = 2 * S * E * M128
    bytes_accessed = (S * E * emb.dtype.itemsize
                      + E * M128 * w1.dtype.itemsize
                      + M128 * 4
                      + S * M128 * h_itemsize)

    return pl.pallas_call(
        _linear_tanh_kernel,
        out_shape=jax.ShapeDtypeStruct((S, M128), h_dtype),
        grid=grid,
        in_specs=[
            pl.BlockSpec((S, E), lambda j: (0, 0)),
            pl.BlockSpec((E, tm), lambda j: (0, j)),
            pl.BlockSpec((1, tm), lambda j: (0, j)),
        ],
        out_specs=pl.BlockSpec((S, tm), lambda j: (0, j)),
        compiler_params=pltpu.CompilerParams(
            dimension_semantics=("arbitrary",),
            vmem_limit_bytes=budget),
        cost_estimate=pl.CostEstimate(flops=flops, transcendentals=S * M128,
                                      bytes_accessed=bytes_accessed),
    )(emb, w1, b1_2d)


def _out_proj(h, w2, b2, *, out_dtype, budget, tile_override=None,
              w2_buffers=3):
    """out = h @ W2 + b2, streaming W2 in lane-dense (M128, tn) tiles."""
    S, M128 = h.shape
    Mw, OUT = w2.shape
    if Mw != M128:                      # mid-dim pad rows (h pad columns are 0)
        w2 = jnp.pad(w2, ((0, M128 - Mw), (0, 0)))
    OUT128 = _round_up(OUT, 128)        # pad OUT only to 128, never to tn
    if OUT128 != OUT:
        w2 = jnp.pad(w2, ((0, 0), (0, OUT128 - OUT)))
        b2 = jnp.pad(b2, ((0, OUT128 - OUT),))
    b2_2d = b2.reshape(1, OUT128).astype(jnp.float32)

    out_itemsize = jnp.dtype(out_dtype).itemsize
    slack = 4 << 20
    fixed = 2 * S * M128 * h.dtype.itemsize + slack          # h stays resident
    per_col = (w2_buffers * M128 * w2.dtype.itemsize          # W2 tiles
               + 2 * 8 * 4                                    # b2 tiles
               + 2 * S * out_itemsize)                        # out tiles
    tn = _choose_tile(OUT128, fixed, per_col, budget, tile_override)
    grid = (OUT128 // tn,)

    # Triple-buffer the W2 stream when the pipeline is deep enough.
    w2_spec = pl.BlockSpec((M128, tn), lambda j: (0, j))
    if w2_buffers > 2 and grid[0] > w2_buffers:
        try:
            w2_spec = pl.BlockSpec((M128, tn), lambda j: (0, j),
                                   pipeline_mode=pl.Buffered(w2_buffers))
        except Exception:   # older jax without pipeline_mode: double buffer
            w2_spec = pl.BlockSpec((M128, tn), lambda j: (0, j))

    flops = 2 * S * M128 * OUT128
    bytes_accessed = (S * M128 * h.dtype.itemsize
                      + M128 * OUT128 * w2.dtype.itemsize
                      + OUT128 * 4
                      + S * OUT128 * out_itemsize)

    out = pl.pallas_call(
        _out_proj_kernel,
        out_shape=jax.ShapeDtypeStruct((S, OUT128), out_dtype),
        grid=grid,
        in_specs=[
            pl.BlockSpec((S, M128), lambda j: (0, 0)),
            w2_spec,
            pl.BlockSpec((1, tn), lambda j: (0, j)),
        ],
        out_specs=pl.BlockSpec((S, tn), lambda j: (0, j)),
        compiler_params=pltpu.CompilerParams(
            dimension_semantics=("parallel",),
            vmem_limit_bytes=budget),
        cost_estimate=pl.CostEstimate(flops=flops, transcendentals=0,
                                      bytes_accessed=bytes_accessed),
    )(h, w2, b2_2d)
    return out[:, :OUT] if OUT128 != OUT else out


def prefix_control_trans(emb, w1, b1, w2, b2, *,
                         weights_dtype=jnp.bfloat16,
                         out_dtype=None,
                         tile_override=None):
    """emb: (S, E) f32 -> (S, n_layer*2*n_embd) via two Pallas kernels.

    weights_dtype: streaming dtype for W1/W2 (bf16 by default; pass
        jnp.float32 for full precision).  Accumulation is always f32.
    out_dtype: kernel-B output dtype (defaults to the streaming dtype).
    tile_override: force a specific lane tile for the W2 stream (testing).
    """
    S, E = emb.shape
    S_pad = _round_up(S, 8)                        # sublane-dense rows
    if S_pad != S:
        emb = jnp.pad(emb, ((0, S_pad - S), (0, 0)))

    if weights_dtype is not None:
        w1 = w1.astype(weights_dtype)
        w2 = w2.astype(weights_dtype)
    if out_dtype is None:
        out_dtype = w2.dtype

    budget = _vmem_budget_bytes()
    h = _linear_tanh(emb, w1, b1, h_dtype=w2.dtype, budget=budget)
    out = _out_proj(h, w2, b2, out_dtype=out_dtype, budget=budget,
                    tile_override=tile_override)
    return out[:S] if S_pad != S else out


def get_past_key_values(batch_size, wte, w1, b1, w2, b2,
                        n_layer, n_head, head_dim, *,
                        weights_dtype=jnp.bfloat16,
                        out_dtype=None,
                        tile_override=None):
    """Mirrors PrefixModel.get_past_key_values.

    Returns [keys_stack, values_stack], each (n_layer, B, n_head, S, head_dim).
    (prefix_dropout == 0.0 -> dropout is identity.)
    """
    num_token, _ = wte.shape
    # input_tokens = arange(num_token)  ->  wte(input_tokens) == wte, so the
    # embedding table is fed to the kernel directly (no XLA gather).
    pkv_one = prefix_control_trans(wte, w1, b1, w2, b2,
                                   weights_dtype=weights_dtype,
                                   out_dtype=out_dtype,
                                   tile_override=tile_override)  # (S, 2L*E)

    # Reshape / permute the SINGLE copy, then broadcast over batch (the prefix
    # is identical for every batch element).  Matches torch:
    #   view(B,S,2L,H,Dh).permute([2,0,3,1,4]).split(L)
    # TODO(synk): when head_dim is a multiple of 128 this permute could be
    # folded into kernel-B's out_specs (lane-dense (S, Dh) blocks written at
    # transposed offsets); skipped here since Dh < 128 in the test config and
    # the bf16 output already halves that traffic.
    pkv_one = pkv_one.reshape(num_token, n_layer * 2, n_head, head_dim)
    pkv_one = jnp.transpose(pkv_one, (1, 2, 0, 3))          # (2L, H, S, Dh)
    pkv = jnp.broadcast_to(
        pkv_one[:, None],
        (n_layer * 2, batch_size, n_head, num_token, head_dim))
    return [pkv[:n_layer], pkv[n_layer:]]


# ---------------------------------------------------------------------------
# Pure-JAX reference (same math as the PyTorch module)
# ---------------------------------------------------------------------------

def reference_past_key_values(batch_size, wte, w1, b1, w2, b2,
                              n_layer, n_head, head_dim):
    num_token, _ = wte.shape
    h = jnp.tanh(wte @ w1 + b1)                     # wte(arange) == wte
    out = h @ w2 + b2
    out = jnp.broadcast_to(out[None], (batch_size,) + out.shape)
    out = out.reshape(batch_size, num_token, n_layer * 2, n_head, head_dim)
    out = jnp.transpose(out, (2, 0, 3, 1, 4))
    return [out[:n_layer], out[n_layer:]]


# ---------------------------------------------------------------------------
# Self-test
# ---------------------------------------------------------------------------

def _make_params(key, num_token, n_embd, mid_dim, out_dim):
    k_wte, k_w1, k_b1, k_w2, k_b2 = jax.random.split(key, 5)
    wte = jax.random.normal(k_wte, (num_token, n_embd), jnp.float32) * 0.02
    w1 = jax.random.normal(k_w1, (n_embd, mid_dim), jnp.float32) * 0.05
    b1 = jax.random.normal(k_b1, (mid_dim,), jnp.float32) * 0.01
    w2 = jax.random.normal(k_w2, (mid_dim, out_dim), jnp.float32) * 0.05
    b2 = jax.random.normal(k_b2, (out_dim,), jnp.float32) * 0.01
    return wte, w1, b1, w2, b2


def _check(got, want, n_layer, batch, n_head, num_token, head_dim,
           atol, rtol):
    for g, w in zip(got, want):
        assert g.shape == (n_layer, batch, n_head, num_token, head_dim), g.shape
        assert jnp.allclose(g.astype(jnp.float32), w, atol=atol, rtol=rtol), (
            float(jnp.max(jnp.abs(g.astype(jnp.float32) - w))))


if __name__ == "__main__":
    key = jax.random.PRNGKey(0)
    k_cfg1, k_cfg2, k_ids = jax.random.split(key, 3)

    # ---- config 1: GPT-Neo-style, scaled down --------------------------------
    batch, seq_len = 2, 8
    num_token, n_embd, n_head, n_layer, mid_dim = 8, 32, 4, 4, 64
    head_dim = n_embd // n_head
    out_dim = n_layer * 2 * n_embd

    wte, w1, b1, w2, b2 = _make_params(k_cfg1, num_token, n_embd, mid_dim, out_dim)
    input_ids = jax.random.randint(k_ids, (batch, seq_len), 0, 100, jnp.int32)

    ref = reference_past_key_values(input_ids.shape[0], wte, w1, b1, w2, b2,
                                    n_layer, n_head, head_dim)

    # default path: bf16 weight streaming + bf16 output (f32 accumulation)
    pvs = get_past_key_values(input_ids.shape[0], wte, w1, b1, w2, b2,
                              n_layer, n_head, head_dim)
    pvs = [jax.block_until_ready(p) for p in pvs]
    _check(pvs, ref, n_layer, batch, n_head, num_token, head_dim,
           atol=5e-3, rtol=5e-2)

    # full-f32 path, tight tolerance
    pvs_f32 = get_past_key_values(input_ids.shape[0], wte, w1, b1, w2, b2,
                                  n_layer, n_head, head_dim,
                                  weights_dtype=jnp.float32,
                                  out_dtype=jnp.float32)
    pvs_f32 = [jax.block_until_ready(p) for p in pvs_f32]
    _check(pvs_f32, ref, n_layer, batch, n_head, num_token, head_dim,
           atol=1e-5, rtol=1e-5)

    # force a multi-step OUT grid (tile_override=128 -> 2 steps here)
    pvs_tiled = get_past_key_values(input_ids.shape[0], wte, w1, b1, w2, b2,
                                    n_layer, n_head, head_dim,
                                    tile_override=128)
    pvs_tiled = [jax.block_until_ready(p) for p in pvs_tiled]
    _check(pvs_tiled, ref, n_layer, batch, n_head, num_token, head_dim,
           atol=5e-3, rtol=5e-2)

    # ---- config 2: deeper OUT grid (exercises Buffered(3) W2 stream) ---------
    batch2 = 2
    num_token2, n_embd2, n_head2, n_layer2, mid_dim2 = 16, 64, 4, 8, 128
    head_dim2 = n_embd2 // n_head2
    out_dim2 = n_layer2 * 2 * n_embd2          # 1024 -> 8 grid steps at tn=128

    wte2, w12, b12, w22, b22 = _make_params(k_cfg2, num_token2, n_embd2,
                                            mid_dim2, out_dim2)
    ref2 = reference_past_key_values(batch2, wte2, w12, b12, w22, b22,
                                     n_layer2, n_head2, head_dim2)
    pvs2 = get_past_key_values(batch2, wte2, w12, b12, w22, b22,
                               n_layer2, n_head2, head_dim2,
                               tile_override=128)
    pvs2 = [jax.block_until_ready(p) for p in pvs2]
    _check(pvs2, ref2, n_layer2, batch2, n_head2, num_token2, head_dim2,
           atol=5e-3, rtol=5e-2)

    print("KERNEL_OK")
</pallas_src>

<mosaic_0001>
module attributes {stable_mosaic.version = 11 : i64} {
  func.func @_linear_tanh_kernel(%arg0: i32, %arg1: memref<8x32xf32, #tpu.memory_space<vmem>>, %arg2: memref<32x128xbf16, #tpu.memory_space<vmem>>, %arg3: memref<1x128xf32, #tpu.memory_space<vmem>>, %arg4: memref<8x128xbf16, #tpu.memory_space<vmem>>) attributes {dimension_semantics = [#tpu.dimension_semantics<arbitrary>], iteration_bounds = array<i64: 1>, scalar_prefetch = 0 : i64, scratch_operands = 0 : i64, tpu.core_type = #tpu.core_type<tc>, window_params = [{pipeline_mode = #tpu.pipeline_mode<synchronous>, transform_indices = @transform_0, window_bounds = array<i64: 8, 32>}, {transform_indices = @transform_1, window_bounds = array<i64: 32, 128>}, {transform_indices = @transform_2, window_bounds = array<i64: 1, 128>}, {transform_indices = @transform_3, window_bounds = array<i64: 8, 128>}]} {
    %c0 = arith.constant 0 : index
    %c0_0 = arith.constant 0 : index
    %0 = vector.load %arg1[%c0, %c0_0] : memref<8x32xf32, #tpu.memory_space<vmem>>, vector<8x32xf32>
    %c0_1 = arith.constant 0 : index
    %c0_2 = arith.constant 0 : index
    %1 = vector.load %arg2[%c0_1, %c0_2] : memref<32x128xbf16, #tpu.memory_space<vmem>>, vector<32x128xbf16>
    %2 = arith.truncf %0 : vector<8x32xf32> to vector<8x32xbf16>
    %cst = arith.constant dense<0.000000e+00> : vector<8x128xf32>
    %3 = tpu.matmul %2, %1, %cst {dimension_numbers = #tpu.dot_dimension_numbers<[1], [0], [0], [1], [0, 0, 1, 1], [], []>} : vector<8x32xbf16>, vector<32x128xbf16>, vector<8x128xf32> -> vector<8x128xf32>
    %c0_3 = arith.constant 0 : index
    %c0_4 = arith.constant 0 : index
    %4 = vector.load %arg3[%c0_3, %c0_4] : memref<1x128xf32, #tpu.memory_space<vmem>>, vector<1x128xf32>
    %5 = vector.broadcast %4 : vector<1x128xf32> to vector<8x128xf32>
    %6 = arith.addf %3, %5 : vector<8x128xf32>
    %7 = math.tanh %6 : vector<8x128xf32>
    %8 = arith.truncf %7 : vector<8x128xf32> to vector<8x128xbf16>
    %c0_5 = arith.constant 0 : index
    %c0_6 = arith.constant 0 : index
    %9 = vector.load %arg4[%c0_5, %c0_6] : memref<8x128xbf16, #tpu.memory_space<vmem>>, vector<8x128xbf16>
    tpu.vector_store %arg4[%c0_5, %c0_6], %8 {strides = array<i32>} : memref<8x128xbf16, #tpu.memory_space<vmem>>, vector<8x128xbf16>,
    return
  }
  func.func @transform_0(%arg0: i32) -> (i32, i32) {
    %c0_i32 = arith.constant 0 : i32
    %c0_i32_0 = arith.constant 0 : i32
    %c0_i32_1 = arith.constant 0 : i32
    return %c0_i32, %c0_i32_0 : i32, i32
  }
  func.func @transform_1(%arg0: i32) -> (i32, i32) {
    %c0_i32 = arith.constant 0 : i32
    %c0_i32_0 = arith.constant 0 : i32
    return %c0_i32, %arg0 : i32, i32
  }
  func.func @transform_2(%arg0: i32) -> (i32, i32) {
    %c0_i32 = arith.constant 0 : i32
    %c0_i32_0 = arith.constant 0 : i32
    return %c0_i32, %arg0 : i32, i32
  }
  func.func @transform_3(%arg0: i32) -> (i32, i32) {
    %c0_i32 = arith.constant 0 : i32
    %c0_i32_0 = arith.constant 0 : i32
    return %c0_i32, %arg0 : i32, i32
  }
}

</mosaic_0001>

<llo_original>
// kernel: tpu_custom_call.1
$region0: #{tpu_custom_call.1}
  #allocation0 [shape = 'u32[]', space=smem, size = 0x4, offset = 0x4, fixed_abs, tag = 'smem constant byte address 0x4 - core index']
  #allocation1 [shape = 'u32[144,128]{1,0:T(1,128)}', space=vmem, size = 0x12000, scoped, tag = 'internal scratch']
  %s0 = inlined_call_operand.hbm [shape: f32[8,32], index: 0, kind: input, shape index: {}]
  %s1 = inlined_call_operand.hbm [shape: bf16[32,128], index: 1, kind: input, shape index: {}]
  %s2 = inlined_call_operand.vmem [shape: f32[1,128], index: 2, kind: input, shape index: {}]
  %s3 = inlined_call_operand.hbm [shape: bf16[8,128], index: 3, kind: output, shape index: {}]
  %s4 = sld [smem:[#allocation0]]
  $region30: #{tpu_custom_call.1} parent=0
    _
  %s6 = ssub.s32 1, %s4
  %s7 = scalar_select 0, %s6, %s4
  $region1: #{tpu_custom_call.1} parent=0
    #allocation2 [shape = 'u8[4096]{0}', space=vmem, size = 0x1000, scoped, tag = 'input window, operand 0, single buffered']
    #allocation3 [shape = 's32[1]{0}', space=sflag, size = 0x4, scoped, tag = 'scoped memory for tpu_custom_call.1']
    #allocation4 [shape = 's32[1]{0}', space=sflag, size = 0x4, scoped, tag = 'scoped memory for tpu_custom_call.1']
    #allocation5 [shape = 'u8[8192]{0}', space=vmem, size = 0x2000, scoped, tag = 'input window, operand 1, single buffered']
    #allocation6 [shape = 's32[1]{0}', space=sflag, size = 0x4, scoped, tag = 'scoped memory for tpu_custom_call.1']
    #allocation7 [shape = 'u8[2048]{0}', space=vmem, size = 0x800, scoped, tag = 'output window, operand 0, single buffered']
    %8 = vsyncpa [#allocation3], 0
    %9 = vsyncpa [#allocation6], 0
    %10 = vsyncpa [#allocation4], 0
    // Predicated region
    $region2: #{tpu_custom_call.1} parent=1 // pred_check
      _
    $region3: #{tpu_custom_call.1} parent=1 // pred_check_branch
      %12 = sbr.rel (0) target = $region5
    $region4: #{tpu_custom_call.1} parent=1 // pred_region
      %s14 = ssub.s32 128, 128
      %15 = vsyncadd [#allocation3], %s14
      %s17 = sshll.u32 [#allocation2], 4
      %s18 = int_to_ptr.vmem [resolvable:$true] %s17
      %20 = dma.hbm_to_vmem [thread:$0]  %s0, 128, %s18, [#allocation3]
    $region5: #{tpu_custom_call.1} parent=1 // pred_fallthru
      _
    // Predicated region
    $region6: #{tpu_custom_call.1} parent=1 // pred_check
      _
    $region7: #{tpu_custom_call.1} parent=1 // pred_check_branch
      %22 = sbr.rel (0) target = $region9
    $region8: #{tpu_custom_call.1} parent=1 // pred_region
      %s24 = ssub.s32 256, 256
      %25 = vsyncadd [#allocation6], %s24
      %s26 = sshll.u32 [#allocation5], 4
      %s27 = int_to_ptr.vmem [resolvable:$true] %s26
      %32 = dma.hbm_to_vmem [thread:$0]  %s1, 256, %s27, [#allocation6], 64, 64, 4
    $region9: #{tpu_custom_call.1} parent=1 // pred_fallthru
      _
    // Predicated region
    $region10: #{tpu_custom_call.1} parent=1 // pred_check
      _
    $region11: #{tpu_custom_call.1} parent=1 // pred_check_branch
      %34 = sbr.rel (0) target = $region13
    $region12: #{tpu_custom_call.1} parent=1 // pred_region
      _
    $region13: #{tpu_custom_call.1} parent=1 // pred_fallthru
      _
    // Predicated region
    $region14: #{tpu_custom_call.1} parent=1 // pred_check
      _
    $region15: #{tpu_custom_call.1} parent=1 // pred_check_branch
      %36 = sbr.rel (0) target = $region17
    $region16: #{tpu_custom_call.1} parent=1 // pred_region
      %37 = dma.done [#allocation3], 128
    $region17: #{tpu_custom_call.1} parent=1 // pred_fallthru
      _
    // Predicated region
    $region18: #{tpu_custom_call.1} parent=1 // pred_check
      _
    $region19: #{tpu_custom_call.1} parent=1 // pred_check_branch
      %39 = sbr.rel (0) target = $region21
    $region20: #{tpu_custom_call.1} parent=1 // pred_region
      %40 = dma.done [#allocation6], 256
    $region21: #{tpu_custom_call.1} parent=1 // pred_fallthru
      _
    %v42 = vld [vmem:[#allocation2] sm:$0xff]
    %v43 = vld [vmem:[#allocation5] sm:$0xf]
    %v44 = vld [vmem:[#allocation5 + $0x4] sm:$0xf]
    %v45 = vld [vmem:[#allocation5 + $0x8] sm:$0xf]
    %v46 = vld [vmem:[#allocation5 + $0xc] sm:$0xf]
    %v47 = vpack.c.bf16 %v42, %v42
    %v48 = vld [vmem:[%s2] sm:$0x1]
    %v50 = vlaneseq
    %v51 = vshrl.u32 %v50, 7
    %v52 = vsub.s32 0, %v51
    %v53 = vrot.slane %v48, %v52
    %v59 = vunpack.c.l.b16 %v43
    %v60 = vunpack.c.l.b16 %v44
    %v61 = vunpack.c.l.b16 %v45
    %v62 = vunpack.c.l.b16 %v46
    %v63 = vpack.c.b16 %v60, %v59
    %v64 = vpack.c.b16 %v62, %v61
    %vm67 = vcmask 261120
    %v69 = vsel %vm67, %v47, 0
    %71 = vmatprep.subr.bf16.mxu0 0
    %72 = vmatpush1.bf16.msra.mxu0 %v63
    %73 = vmatprep.subr.bf16.mxu0 0
    %74 = vmatpush1.bf16.msra.mxu0 %v64
    %75 = vmatprep.subr.bf16.mxu0 0
    %76 = vmatpush1.bf16.msra.mxu0 0
    %77 = vmatprep.subr.bf16.mxu0 0
    %78 = vmatpush1.bf16.msra.mxu0 0
    %79 = vmatprep.subr.bf16.mxu0 0
    %80 = vmatpush1.bf16.msra.mxu0 0
    %81 = vmatprep.subr.bf16.mxu0 0
    %82 = vmatpush1.bf16.msra.mxu0 0
    %83 = vmatprep.subr.bf16.mxu0 0
    %84 = vmatpush1.bf16.msra.mxu0 0
    %85 = vmatprep.subr.bf16.mxu0 0
    %86 = vmatpush1.bf16.msra.mxu0 0
    %87 = vmatprep.subr.bf16.mxu0 0
    %88 = vmatpush1.bf16.msra.mxu0 0
    %89 = vmatprep.subr.bf16.mxu0 0
    %90 = vmatpush1.bf16.msra.mxu0 0
    %91 = vmatprep.subr.bf16.mxu0 0
    %92 = vmatpush1.bf16.msra.mxu0 0
    %93 = vmatprep.subr.bf16.mxu0 0
    %94 = vmatpush1.bf16.msra.mxu0 0
    %95 = vmatprep.subr.bf16.mxu0 0
    %96 = vmatpush1.bf16.msra.mxu0 0
    %97 = vmatprep.subr.bf16.mxu0 0
    %98 = vmatpush1.bf16.msra.mxu0 0
    %99 = vmatprep.subr.bf16.mxu0 0
    %100 = vmatpush1.bf16.msra.mxu0 0
    %101 = vmatprep.subr.bf16.mxu0 0
    %102 = vmatpush1.bf16.msra.mxu0 0
    %103 = vmatprep.mubr.bf16.mxu0 0
    %104 = vmatmul.mubr.bf16.gmra.mrb[0].mxu0 %v69
    %v105 = vpop.f32.mrb[0].mxu0
    %v106 = vadd.f32 %v53, %v105
    %v107 = vpop.f32.mrb[0].mxu0
    %v108 = vpop.f32.mrb[0].mxu0
    %v109 = vpop.f32.mrb[0].mxu0
    %110 = vdwg.mxu0
    %v111 = vtanh.pop %v106
    %v112 = vpack.c.bf16 %v111, %v111
    %113 = vst [vmem:[#allocation7] sm:$0xf] %v112
    // Predicated region
    $region22: #{tpu_custom_call.1} parent=1 // pred_check
      _
    $region23: #{tpu_custom_call.1} parent=1 // pred_check_branch
      %115 = sbr.rel (0) target = $region25
    $region24: #{tpu_custom_call.1} parent=1 // pred_region
      %s117 = ssub.s32 64, 64
      %118 = vsyncadd [#allocation4], %s117
      %s120 = sshll.u32 [#allocation7], 4
      %s121 = int_to_ptr.vmem [resolvable:$true] %s120
      %123 = dma.vmem_to_hbm [thread:$0]  %s121, 64, %s3, [#allocation4]
    $region25: #{tpu_custom_call.1} parent=1 // pred_fallthru
      _
    // Predicated region
    $region26: #{tpu_custom_call.1} parent=1 // pred_check
      _
    $region27: #{tpu_custom_call.1} parent=1 // pred_check_branch
      %125 = sbr.rel (0) target = $region29
    $region28: #{tpu_custom_call.1} parent=1 // pred_region
      %126 = dma.done [#allocation4], 64
    $region29: #{tpu_custom_call.1} parent=1 // pred_fallthru
      _
    %127 = vsyncpa [#allocation3], 1
    %128 = vsyncpa [#allocation6], 1
    %129 = vsyncpa [#allocation4], 1

</llo_original>
